<compile_context>
chip_gen: v7x
topology: tpu7x:2x2x1
jax: 0.10.0
libtpu: 0.0.40
codegen_flags: <defaults>
</compile_context>

<pallas_src>
import jax
import jax.numpy as jnp
from jax.experimental import pallas as pl
from jax.experimental.pallas import tpu as pltpu

_SUBLANE = 8
_LANE = 128
_MIN_PALLAS_BYTES = 1 * 1024 * 1024   # below this, XLA's fused elementwise wins


def _round_up(n, m):
    return ((n + m - 1) // m) * m


def _chip_config():
    """Return (target_tile_bytes, vmem_limit_bytes, two_tensorcores)."""
    target = 4 * 1024 * 1024          # v5e / v6e: step overhead already < ~6%
    vmem_limit = 32 * 1024 * 1024     # covers 2x-buffered x+out tiles + gate row
    two_cores = False
    try:
        info = pltpu.get_tpu_info()
        vmem = getattr(info, "vmem_capacity_bytes", None)
        if vmem is not None and vmem <= 64 * 1024 * 1024:
            # v7x-like: 64 MiB VMEM per TC, 2 TensorCores, ~3.2 TB/s HBM.
            target = 8 * 1024 * 1024
            vmem_limit = 48 * 1024 * 1024
            two_cores = True
    except Exception:
        pass  # conservative defaults above are safe on all generations
    return target, vmem_limit, two_cores


def _gate_mul_kernel(x_ref, z_ref, o_ref):
    # (tb, tf) * (1, tf) broadcast multiply; pure VPU filler under the DMA.
    o_ref[...] = (x_ref[...] * z_ref[...]).astype(o_ref.dtype)


def _gated_multiply_pallas(x, z):
    """out[b, f] = x[b, f] * z[f] via a tiled Pallas kernel (no padding)."""
    B, F = x.shape
    itemsize = jnp.dtype(x.dtype).itemsize
    target, vmem_limit, two_cores = _chip_config()

    # ---- feature tile: full F when it fits, else a 128-multiple (partial last
    # block allowed). Full-F blocks are legal even when F % 128 != 0.
    if F <= _LANE or F * itemsize * _SUBLANE <= target:
        tf = F
    else:
        tf = (target // (_SUBLANE * itemsize)) // _LANE * _LANE
        tf = max(_LANE, min(tf, (F // _LANE) * _LANE))
    n_f = pl.cdiv(F, tf)

    # ---- batch tile: multiple of 8 (or the full B when B < 8), sized from the
    # real dtype so the tile hits the per-generation byte target.
    if B <= _SUBLANE:
        tb = B
    else:
        cap = (B // _SUBLANE) * _SUBLANE
        tb = (target // max(1, tf * itemsize)) // _SUBLANE * _SUBLANE
        tb = max(_SUBLANE, min(tb, cap))
        # Only split into >=2 batch blocks when a second TensorCore exists
        # (v7x); on single-TC chips this would just add per-step overhead.
        if two_cores and n_f < 2 and tb >= B:
            tb = max(_SUBLANE, min(_round_up(pl.cdiv(B, 2), _SUBLANE), cap))
    n_b = pl.cdiv(B, tb)

    # Gate row in the input dtype (avoid promoting whole x tiles to f32).
    z_row = z.astype(x.dtype).reshape(1, F)

    # Grid order (feature, batch): the gate block index (0, j) is constant
    # across the inner batch loop, so the gate row stays resident in VMEM.
    out = pl.pallas_call(
        _gate_mul_kernel,
        out_shape=jax.ShapeDtypeStruct((B, F), x.dtype),
        grid_spec=pltpu.PrefetchScalarGridSpec(
            num_scalar_prefetch=0,
            grid=(n_f, n_b),
            in_specs=[
                pl.BlockSpec((tb, tf), lambda j, i: (i, j)),   # x tile
                pl.BlockSpec((1, tf), lambda j, i: (0, j)),    # gate row (shared)
            ],
            out_specs=pl.BlockSpec((tb, tf), lambda j, i: (i, j)),
        ),
        compiler_params=pltpu.CompilerParams(
            dimension_semantics=("parallel", "parallel"),
            vmem_limit_bytes=vmem_limit,
        ),
    )(x, z_row)
    return out


def stochastic_gates_forward(x, mus, sigma, *, training=False, key=None,
                             use_pallas=None):
    """x: [B, F], mus: [F]. Returns x * clamp(mus + sigma*noise*training, 0, 1).

    Output dtype is x.dtype on both the Pallas and fallback paths.
    """
    B, F = x.shape
    assert mus.shape == (F,)

    # Gate construction is O(F), negligible next to the O(B*F) multiply.
    if training:
        assert key is not None, "training=True requires a PRNG key"
        noise = jax.random.normal(key, (F,), dtype=jnp.float32)
        z = jnp.clip(mus.astype(jnp.float32) + jnp.float32(sigma) * noise, 0.0, 1.0)
    else:
        z = jnp.clip(mus.astype(jnp.float32), 0.0, 1.0)

    if use_pallas is None:
        use_pallas = (B * F * jnp.dtype(x.dtype).itemsize) >= _MIN_PALLAS_BYTES
    if not use_pallas:
        return (x * z.astype(x.dtype)[None, :]).astype(x.dtype)
    return _gated_multiply_pallas(x, z)


def stochastic_gates_reference(x, mus, sigma, *, training=False, key=None):
    if training:
        noise = jax.random.normal(key, mus.shape, dtype=jnp.float32)
    else:
        noise = jnp.zeros_like(mus)
    z = jnp.clip(mus + sigma * noise, 0.0, 1.0)
    return (x * z[None, :].astype(x.dtype)).astype(x.dtype)


if __name__ == "__main__":
    # Module hyperparameters (size = number of features being gated).
    size = 128
    sigma = 0.5
    lam = 0.1  # only used by get_reg(); not part of forward
    batch = 16

    key = jax.random.PRNGKey(0)
    kx, kmu, knoise, kx2, kmu2 = jax.random.split(key, 5)

    # Deterministic parameter init: gate_init=None -> mus = ones(size),
    # perturbed slightly so the clamp path is exercised.
    mus = jnp.ones((size,), dtype=jnp.float32) \
        + 0.2 * jax.random.normal(kmu, (size,), dtype=jnp.float32)
    x = jax.random.normal(kx, (batch, size), dtype=jnp.float32)

    # Eval mode (training=False -> zero noise, matches PyTorch *self.training).
    out_eval = jax.block_until_ready(
        stochastic_gates_forward(x, mus, sigma, training=False, use_pallas=True))
    ref_eval = stochastic_gates_reference(x, mus, sigma, training=False)
    assert jnp.allclose(out_eval, ref_eval, atol=1e-6), "eval mismatch"

    # Training mode (same key in kernel wrapper and reference).
    out_train = jax.block_until_ready(
        stochastic_gates_forward(x, mus, sigma, training=True, key=knoise,
                                 use_pallas=True))
    ref_train = stochastic_gates_reference(x, mus, sigma, training=True, key=knoise)
    assert jnp.allclose(out_train, ref_train, atol=1e-6), "train mismatch"

    # Ragged shape: exercises the pad-free partial-block path
    # (B not a multiple of 8, F not a multiple of 128).
    b2, f2 = 13, 96
    mus2 = jnp.ones((f2,), dtype=jnp.float32) \
        + 0.2 * jax.random.normal(kmu2, (f2,), dtype=jnp.float32)
    x2 = jax.random.normal(kx2, (b2, f2), dtype=jnp.float32)
    out2 = jax.block_until_ready(
        stochastic_gates_forward(x2, mus2, sigma, training=False, use_pallas=True))
    ref2 = stochastic_gates_reference(x2, mus2, sigma, training=False)
    assert jnp.allclose(out2, ref2, atol=1e-6), "ragged mismatch"

    print("KERNEL_OK")
</pallas_src>

<mosaic_0001>
module attributes {stable_mosaic.version = 11 : i64} {
  func.func @_gate_mul_kernel(%arg0: i32, %arg1: i32, %arg2: memref<16x128xf32, #tpu.memory_space<vmem>>, %arg3: memref<1x128xf32, #tpu.memory_space<vmem>>, %arg4: memref<16x128xf32, #tpu.memory_space<vmem>>) attributes {dimension_semantics = [#tpu.dimension_semantics<parallel>, #tpu.dimension_semantics<parallel>], iteration_bounds = array<i64: 1, 1>, scalar_prefetch = 0 : i64, scratch_operands = 0 : i64, tpu.core_type = #tpu.core_type<tc>, window_params = [{transform_indices = @transform_0, window_bounds = array<i64: 16, 128>}, {transform_indices = @transform_1, window_bounds = array<i64: 1, 128>}, {transform_indices = @transform_2, window_bounds = array<i64: 16, 128>}]} {
    %c0 = arith.constant 0 : index
    %c0_0 = arith.constant 0 : index
    %0 = vector.load %arg2[%c0, %c0_0] : memref<16x128xf32, #tpu.memory_space<vmem>>, vector<16x128xf32>
    %c0_1 = arith.constant 0 : index
    %c0_2 = arith.constant 0 : index
    %1 = vector.load %arg3[%c0_1, %c0_2] : memref<1x128xf32, #tpu.memory_space<vmem>>, vector<1x128xf32>
    %2 = vector.broadcast %1 : vector<1x128xf32> to vector<16x128xf32>
    %3 = arith.mulf %0, %2 : vector<16x128xf32>
    %c0_3 = arith.constant 0 : index
    %c0_4 = arith.constant 0 : index
    %4 = vector.load %arg4[%c0_3, %c0_4] : memref<16x128xf32, #tpu.memory_space<vmem>>, vector<16x128xf32>
    tpu.vector_store %arg4[%c0_3, %c0_4], %3 {strides = array<i32>} : memref<16x128xf32, #tpu.memory_space<vmem>>, vector<16x128xf32>,
    return
  }
  func.func @transform_0(%arg0: i32, %arg1: i32) -> (i32, i32) {
    %c0_i32 = arith.constant 0 : i32
    return %arg1, %arg0 : i32, i32
  }
  func.func @transform_1(%arg0: i32, %arg1: i32) -> (i32, i32) {
    %c0_i32 = arith.constant 0 : i32
    %c0_i32_0 = arith.constant 0 : i32
    return %c0_i32, %arg0 : i32, i32
  }
  func.func @transform_2(%arg0: i32, %arg1: i32) -> (i32, i32) {
    %c0_i32 = arith.constant 0 : i32
    return %arg1, %arg0 : i32, i32
  }
}

</mosaic_0001>

<llo_original>
// kernel: tpu_custom_call.1
$region0: #{tpu_custom_call.1}
  #allocation0 [shape = 'u32[]', space=smem, size = 0x4, offset = 0x4, fixed_abs, tag = 'smem constant byte address 0x4 - core index']
  #allocation1 [shape = 'u32[144,128]{1,0:T(1,128)}', space=vmem, size = 0x12000, scoped, tag = 'internal scratch']
  %s0 = inlined_call_operand.hbm [shape: f32[16,128], index: 0, kind: input, shape index: {}]
  %s1 = inlined_call_operand.vmem [shape: f32[1,128], index: 1, kind: input, shape index: {}]
  %s2 = inlined_call_operand.hbm [shape: f32[16,128], index: 2, kind: output, shape index: {}]
  %s3 = sld [smem:[#allocation0]]
  $region22: #{tpu_custom_call.1} parent=0
    _
  %s5 = ssub.s32 1, %s3
  %s6 = scalar_select 0, %s5, %s3
  $region1: #{tpu_custom_call.1} parent=0
    #allocation2 [shape = 'u8[8192]{0}', space=vmem, size = 0x2000, scoped, tag = 'input window, operand 0, single buffered']
    #allocation3 [shape = 's32[1]{0}', space=sflag, size = 0x4, scoped, tag = 'scoped memory for tpu_custom_call.1']
    #allocation4 [shape = 's32[1]{0}', space=sflag, size = 0x4, scoped, tag = 'scoped memory for tpu_custom_call.1']
    #allocation5 [shape = 'u8[8192]{0}', space=vmem, size = 0x2000, scoped, tag = 'output window, operand 0, single buffered']
    %7 = vsyncpa [#allocation3], 0
    %8 = vsyncpa [#allocation4], 0
    // Predicated region
    $region2: #{tpu_custom_call.1} parent=1 // pred_check
      _
    $region3: #{tpu_custom_call.1} parent=1 // pred_check_branch
      %10 = sbr.rel (0) target = $region5
    $region4: #{tpu_custom_call.1} parent=1 // pred_region
      %s12 = ssub.s32 256, 256
      %13 = vsyncadd [#allocation3], %s12
      %s14 = sshll.u32 [#allocation2], 4
      %s15 = int_to_ptr.vmem [resolvable:$true] %s14
      %20 = dma.hbm_to_vmem [thread:$0]  %s0, 256, %s15, [#allocation3], 128, 128, 8
    $region5: #{tpu_custom_call.1} parent=1 // pred_fallthru
      _
    // Predicated region
    $region6: #{tpu_custom_call.1} parent=1 // pred_check
      _
    $region7: #{tpu_custom_call.1} parent=1 // pred_check_branch
      %22 = sbr.rel (0) target = $region9
    $region8: #{tpu_custom_call.1} parent=1 // pred_region
      _
    $region9: #{tpu_custom_call.1} parent=1 // pred_fallthru
      _
    // Predicated region
    $region10: #{tpu_custom_call.1} parent=1 // pred_check
      _
    $region11: #{tpu_custom_call.1} parent=1 // pred_check_branch
      %24 = sbr.rel (0) target = $region13
    $region12: #{tpu_custom_call.1} parent=1 // pred_region
      %25 = dma.done [#allocation3], 256
    $region13: #{tpu_custom_call.1} parent=1 // pred_fallthru
      _
    %v26 = vld [vmem:[#allocation2] sm:$0xff]
    %v27 = vld [vmem:[#allocation2 + $0x8] sm:$0xff]
    %v28 = vld [vmem:[%s1] sm:$0x1]
    %v30 = vlaneseq
    %v31 = vshrl.u32 %v30, 7
    %v32 = vsub.s32 0, %v31
    %v33 = vrot.slane %v28, %v32
    %v35 = vmul.f32 %v26, %v33
    %v36 = vmul.f32 %v27, %v33
    %37 = vst [vmem:[#allocation5] sm:$0xff] %v35
    %38 = vst [vmem:[#allocation5 + $0x8] sm:$0xff] %v36
    // Predicated region
    $region14: #{tpu_custom_call.1} parent=1 // pred_check
      _
    $region15: #{tpu_custom_call.1} parent=1 // pred_check_branch
      %40 = sbr.rel (0) target = $region17
    $region16: #{tpu_custom_call.1} parent=1 // pred_region
      %s42 = ssub.s32 256, 256
      %43 = vsyncadd [#allocation4], %s42
      %s44 = sshll.u32 [#allocation5], 4
      %s45 = int_to_ptr.vmem [resolvable:$true] %s44
      %50 = dma.vmem_to_hbm [thread:$0]  %s45, 256, %s2, [#allocation4], 128, 128, 8
    $region17: #{tpu_custom_call.1} parent=1 // pred_fallthru
      _
    // Predicated region
    $region18: #{tpu_custom_call.1} parent=1 // pred_check
      _
    $region19: #{tpu_custom_call.1} parent=1 // pred_check_branch
      %52 = sbr.rel (0) target = $region21
    $region20: #{tpu_custom_call.1} parent=1 // pred_region
      %53 = dma.done [#allocation4], 256
    $region21: #{tpu_custom_call.1} parent=1 // pred_fallthru
      _
    %54 = vsyncpa [#allocation3], 1
    %55 = vsyncpa [#allocation4], 1

</llo_original>
